<compile_context>
chip_gen: v6e
topology: v6e:2x2x1
jax: 0.10.0
libtpu: 0.0.40
codegen_flags: <defaults>
</compile_context>

<pallas_src>
import functools

import jax
import jax.numpy as jnp
from jax.experimental import pallas as pl
from jax.experimental.pallas import tpu as pltpu


# ---------------------------------------------------------------------------
# Kernel
# ---------------------------------------------------------------------------
def _mlp_kernel(*refs, n_hidden_layers: int):
    """Fused MLP forward for one batch tile.

    refs = (x_ref, w0, b0, ..., w_{L-1}, b_{L-1}, wf, bf, out_ref)
      * hidden weights w_i: (prev_dim, hidden), bf16 (or f32) MXU operands
      * biases:             (1, hidden) f32
      * wf: (1, hidden) f32, 1/gamma already folded in
      * bf: (1, 1) f32,      1/gamma already folded in
    """
    x_ref = refs[0]
    out_ref = refs[-1]
    p = refs[1:-1]

    h = x_ref[...].astype(jnp.float32)
    for i in range(n_hidden_layers):
        w = p[2 * i][...]                                  # (prev, hidden)
        b = p[2 * i + 1][...]                              # (1, hidden) f32
        # bf16 MXU matmul, f32 accumulation; bias-add + ReLU stay in f32
        # (v5e VPU has no bf16 path).
        h = jnp.dot(h.astype(w.dtype), w,
                    preferred_element_type=jnp.float32) + b
        h = jnp.maximum(h, 0.0)

    wf = p[-2][...]                                        # (1, hidden) f32
    bf = p[-1][...]                                        # (1, 1) f32
    # hidden -> 1 projection as VPU multiply + XLU lane-reduce instead of an
    # N=1 MXU pass; 1/gamma is already baked into wf/bf.
    y = jnp.sum(h * wf, axis=-1, keepdims=True) + bf
    out_ref[...] = y.astype(out_ref.dtype)


# ---------------------------------------------------------------------------
# Parameter init (deterministic re-implementation of DeepNN.__init__)
# ---------------------------------------------------------------------------
def init_deepnn_params(key, d: int, hidden_size: int, depth: int,
                       mode: str = "special"):
    """Returns [w0, b0, ..., w_final, b_final], weights as (in_dim, out_dim)."""
    params = []
    prev_dim = d
    gain_relu = jnp.sqrt(2.0)  # nn.init.calculate_gain('relu')
    for _ in range(depth):
        key, wk = jax.random.split(key)
        if mode == "special":
            std = gain_relu / jnp.sqrt(jnp.float32(prev_dim))
            w = jax.random.normal(wk, (prev_dim, hidden_size), jnp.float32) * std
        else:
            limit = jnp.sqrt(6.0 / (prev_dim + hidden_size))
            w = jax.random.uniform(wk, (prev_dim, hidden_size), jnp.float32,
                                   -limit, limit)
        b = jnp.zeros((1, hidden_size), jnp.float32)
        params.extend([w, b])
        prev_dim = hidden_size

    key, wk = jax.random.split(key)
    if mode == "special":
        wf = jax.random.normal(wk, (prev_dim, 1), jnp.float32) * 0.01
    else:
        limit = jnp.sqrt(6.0 / (prev_dim + 1))
        wf = jax.random.uniform(wk, (prev_dim, 1), jnp.float32, -limit, limit)
    bf = jnp.zeros((1, 1), jnp.float32)
    params.extend([wf, bf])
    return params


# ---------------------------------------------------------------------------
# Pallas-backed forward
# ---------------------------------------------------------------------------
def deepnn_forward(x, params, depth: int, gamma: float = 1.0, *,
                   weight_dtype=jnp.bfloat16, block_b: int = 512):
    """DeepNN forward.  x: (B, d) f32 -> (B,) f32, matches
    `self.network(x).squeeze() / gamma` (bf16 weights, f32 accumulation)."""
    B, d = x.shape
    hidden = params[0].shape[1]
    inv_gamma = 1.0 / float(gamma)

    # --- parameter prep (static, once per call) ------------------------------
    kparams = []
    for i in range(depth):
        kparams.append(params[2 * i].astype(weight_dtype))      # (prev, hidden)
        kparams.append(params[2 * i + 1].astype(jnp.float32))   # (1, hidden)
    wf = (params[-2].astype(jnp.float32) * inv_gamma).reshape(1, hidden)
    bf = (params[-1].astype(jnp.float32) * inv_gamma).reshape(1, 1)
    kparams.extend([wf, bf])

    # --- batch tiling ---------------------------------------------------------
    TB = max(8, min(block_b, ((B + 7) // 8) * 8))
    TB = ((TB + 7) // 8) * 8
    B_pad = ((B + TB - 1) // TB) * TB
    if B_pad != B:
        x = jnp.pad(x, ((0, B_pad - B), (0, 0)))
    num_tiles = pl.cdiv(B_pad, TB)

    x_spec = pl.BlockSpec((TB, d), lambda i: (i, 0))
    out_spec = pl.BlockSpec((TB, 1), lambda i: (i, 0))

    # --- VMEM budget + cost hint ---------------------------------------------
    param_bytes = sum(p.size * p.dtype.itemsize for p in kparams)
    act_bytes = TB * (2 * d + 4 * hidden + 4) * 4     # x dbl-buf + live acts + out
    vmem_limit = int(min(64 * 2 ** 20,
                         max(32 * 2 ** 20, 2 * (param_bytes + act_bytes))))

    flops = 2 * B_pad * (d * hidden + (depth - 1) * hidden * hidden + hidden)
    bytes_accessed = int(B_pad * d * 4 + param_bytes + B_pad * 4)
    cost = pl.CostEstimate(flops=flops, transcendentals=0,
                           bytes_accessed=bytes_accessed)

    compiler_params = pltpu.CompilerParams(
        dimension_semantics=("parallel",),   # shard batch tiles across TCs (v7x)
        vmem_limit_bytes=vmem_limit,
    )

    kernel = functools.partial(_mlp_kernel, n_hidden_layers=depth)

    def _call(resident_params: bool):
        if resident_params:
            # Weights/biases never change across grid steps -> single buffer
            # (halves their VMEM footprint vs default double buffering).
            pspecs = [pl.BlockSpec(p.shape, lambda i: (0, 0),
                                   pipeline_mode=pl.Buffered(1))
                      for p in kparams]
        else:
            pspecs = [pl.BlockSpec(p.shape, lambda i: (0, 0)) for p in kparams]
        return pl.pallas_call(
            kernel,
            out_shape=jax.ShapeDtypeStruct((B_pad, 1), jnp.float32),
            grid=(num_tiles,),
            in_specs=[x_spec] + pspecs,
            out_specs=out_spec,
            compiler_params=compiler_params,
            cost_estimate=cost,
        )(x, *kparams)

    try:
        out = _call(True)
    except Exception:
        # Fallback for jax versions without BlockSpec pipeline_mode support.
        out = _call(False)

    return jnp.squeeze(out[:B])


# ---------------------------------------------------------------------------
# Pure-JAX reference (dtype-parameterized so it can mirror the kernel exactly)
# ---------------------------------------------------------------------------
def deepnn_forward_ref(x, params, depth: int, gamma: float = 1.0,
                       weight_dtype=jnp.float32):
    inv_gamma = 1.0 / float(gamma)
    h = x.astype(jnp.float32)
    for i in range(depth):
        w = params[2 * i].astype(weight_dtype)
        b = params[2 * i + 1].astype(jnp.float32)
        h = jnp.maximum(
            jnp.dot(h.astype(weight_dtype), w,
                    preferred_element_type=jnp.float32) + b, 0.0)
    wf = params[-2].astype(jnp.float32) * inv_gamma
    bf = params[-1].astype(jnp.float32) * inv_gamma
    return jnp.squeeze(jnp.dot(h, wf) + bf)


if __name__ == "__main__":
    d, hidden_size, depth, gamma = 16, 32, 3, 2.0
    batch = 8

    key = jax.random.PRNGKey(0)
    pkey, xkey = jax.random.split(key)
    params = init_deepnn_params(pkey, d, hidden_size, depth, mode="special")
    x = jax.random.normal(xkey, (batch, d), jnp.float32)

    out = deepnn_forward(x, params, depth, gamma)   # bf16 weights, f32 accum
    out = jax.block_until_ready(out)
    assert out.shape == (batch,)

    # Exact-semantics check vs a reference using the same dtype choices.
    ref_bf16 = deepnn_forward_ref(x, params, depth, gamma,
                                  weight_dtype=jnp.bfloat16)
    assert jnp.allclose(out, ref_bf16, atol=1e-4, rtol=1e-4)

    # Loose check vs the pure-f32 PyTorch-equivalent math (bf16 MXU weights).
    ref_f32 = deepnn_forward_ref(x, params, depth, gamma,
                                 weight_dtype=jnp.float32)
    assert jnp.allclose(out, ref_f32, atol=1e-2, rtol=1e-2)

    print("KERNEL_OK")
</pallas_src>

<mosaic_0001>
module attributes {stable_mosaic.version = 11 : i64} {
  func.func @_mlp_kernel(%arg0: i32, %arg1: memref<8x16xf32, #tpu.memory_space<vmem>>, %arg2: memref<16x32xbf16, #tpu.memory_space<vmem>>, %arg3: memref<1x32xf32, #tpu.memory_space<vmem>>, %arg4: memref<32x32xbf16, #tpu.memory_space<vmem>>, %arg5: memref<1x32xf32, #tpu.memory_space<vmem>>, %arg6: memref<32x32xbf16, #tpu.memory_space<vmem>>, %arg7: memref<1x32xf32, #tpu.memory_space<vmem>>, %arg8: memref<1x32xf32, #tpu.memory_space<vmem>>, %arg9: memref<1x1xf32, #tpu.memory_space<vmem>>, %arg10: memref<8x1xf32, #tpu.memory_space<vmem>>) attributes {dimension_semantics = [#tpu.dimension_semantics<parallel>], iteration_bounds = array<i64: 1>, scalar_prefetch = 0 : i64, scratch_operands = 0 : i64, tpu.core_type = #tpu.core_type<tc>, window_params = [{transform_indices = @transform_0, window_bounds = array<i64: 8, 16>}, {pipeline_mode = #tpu.pipeline_mode<synchronous>, transform_indices = @transform_1, window_bounds = array<i64: 16, 32>}, {pipeline_mode = #tpu.pipeline_mode<synchronous>, transform_indices = @transform_2, window_bounds = array<i64: 1, 32>}, {pipeline_mode = #tpu.pipeline_mode<synchronous>, transform_indices = @transform_3, window_bounds = array<i64: 32, 32>}, {pipeline_mode = #tpu.pipeline_mode<synchronous>, transform_indices = @transform_4, window_bounds = array<i64: 1, 32>}, {pipeline_mode = #tpu.pipeline_mode<synchronous>, transform_indices = @transform_5, window_bounds = array<i64: 32, 32>}, {pipeline_mode = #tpu.pipeline_mode<synchronous>, transform_indices = @transform_6, window_bounds = array<i64: 1, 32>}, {pipeline_mode = #tpu.pipeline_mode<synchronous>, transform_indices = @transform_7, window_bounds = array<i64: 1, 32>}, {pipeline_mode = #tpu.pipeline_mode<synchronous>, transform_indices = @transform_8, window_bounds = array<i64: 1, 1>}, {transform_indices = @transform_9, window_bounds = array<i64: 8, 1>}]} {
    %c0 = arith.constant 0 : index
    %c0_0 = arith.constant 0 : index
    %0 = vector.load %arg1[%c0, %c0_0] : memref<8x16xf32, #tpu.memory_space<vmem>>, vector<8x16xf32>
    %c0_1 = arith.constant 0 : index
    %c0_2 = arith.constant 0 : index
    %1 = vector.load %arg2[%c0_1, %c0_2] : memref<16x32xbf16, #tpu.memory_space<vmem>>, vector<16x32xbf16>
    %c0_3 = arith.constant 0 : index
    %c0_4 = arith.constant 0 : index
    %2 = vector.load %arg3[%c0_3, %c0_4] : memref<1x32xf32, #tpu.memory_space<vmem>>, vector<1x32xf32>
    %3 = arith.truncf %0 : vector<8x16xf32> to vector<8x16xbf16>
    %cst = arith.constant dense<0.000000e+00> : vector<8x32xf32>
    %4 = tpu.matmul %3, %1, %cst {dimension_numbers = #tpu.dot_dimension_numbers<[1], [0], [0], [1], [0, 0, 1, 1], [], []>} : vector<8x16xbf16>, vector<16x32xbf16>, vector<8x32xf32> -> vector<8x32xf32>
    %5 = vector.broadcast %2 : vector<1x32xf32> to vector<8x32xf32>
    %6 = arith.addf %4, %5 : vector<8x32xf32>
    %cst_5 = arith.constant 0.000000e+00 : f32
    %7 = vector.broadcast %cst_5 : f32 to vector<8x32xf32>
    %8 = arith.maximumf %6, %7 : vector<8x32xf32>
    %c0_6 = arith.constant 0 : index
    %c0_7 = arith.constant 0 : index
    %9 = vector.load %arg4[%c0_6, %c0_7] : memref<32x32xbf16, #tpu.memory_space<vmem>>, vector<32x32xbf16>
    %c0_8 = arith.constant 0 : index
    %c0_9 = arith.constant 0 : index
    %10 = vector.load %arg5[%c0_8, %c0_9] : memref<1x32xf32, #tpu.memory_space<vmem>>, vector<1x32xf32>
    %11 = arith.truncf %8 : vector<8x32xf32> to vector<8x32xbf16>
    %cst_10 = arith.constant dense<0.000000e+00> : vector<8x32xf32>
    %12 = tpu.matmul %11, %9, %cst_10 {dimension_numbers = #tpu.dot_dimension_numbers<[1], [0], [0], [1], [0, 0, 1, 1], [], []>} : vector<8x32xbf16>, vector<32x32xbf16>, vector<8x32xf32> -> vector<8x32xf32>
    %13 = vector.broadcast %10 : vector<1x32xf32> to vector<8x32xf32>
    %14 = arith.addf %12, %13 : vector<8x32xf32>
    %cst_11 = arith.constant 0.000000e+00 : f32
    %15 = vector.broadcast %cst_11 : f32 to vector<8x32xf32>
    %16 = arith.maximumf %14, %15 : vector<8x32xf32>
    %c0_12 = arith.constant 0 : index
    %c0_13 = arith.constant 0 : index
    %17 = vector.load %arg6[%c0_12, %c0_13] : memref<32x32xbf16, #tpu.memory_space<vmem>>, vector<32x32xbf16>
    %c0_14 = arith.constant 0 : index
    %c0_15 = arith.constant 0 : index
    %18 = vector.load %arg7[%c0_14, %c0_15] : memref<1x32xf32, #tpu.memory_space<vmem>>, vector<1x32xf32>
    %19 = arith.truncf %16 : vector<8x32xf32> to vector<8x32xbf16>
    %cst_16 = arith.constant dense<0.000000e+00> : vector<8x32xf32>
    %20 = tpu.matmul %19, %17, %cst_16 {dimension_numbers = #tpu.dot_dimension_numbers<[1], [0], [0], [1], [0, 0, 1, 1], [], []>} : vector<8x32xbf16>, vector<32x32xbf16>, vector<8x32xf32> -> vector<8x32xf32>
    %21 = vector.broadcast %18 : vector<1x32xf32> to vector<8x32xf32>
    %22 = arith.addf %20, %21 : vector<8x32xf32>
    %cst_17 = arith.constant 0.000000e+00 : f32
    %23 = vector.broadcast %cst_17 : f32 to vector<8x32xf32>
    %24 = arith.maximumf %22, %23 : vector<8x32xf32>
    %c0_18 = arith.constant 0 : index
    %c0_19 = arith.constant 0 : index
    %25 = vector.load %arg8[%c0_18, %c0_19] : memref<1x32xf32, #tpu.memory_space<vmem>>, vector<1x32xf32>
    %c0_20 = arith.constant 0 : index
    %c0_21 = arith.constant 0 : index
    %26 = vector.load %arg9[%c0_20, %c0_21] : memref<1x1xf32, #tpu.memory_space<vmem>>, vector<1x1xf32>
    %27 = vector.broadcast %25 : vector<1x32xf32> to vector<8x32xf32>
    %28 = arith.mulf %24, %27 : vector<8x32xf32>
    %cst_22 = arith.constant dense<0.000000e+00> : vector<8xf32>
    %29 = vector.multi_reduction <add>, %28, %cst_22 [1] : vector<8x32xf32> to vector<8xf32>
    %30 = vector.shape_cast %29 : vector<8xf32> to vector<8x1xf32>
    %31 = vector.broadcast %26 : vector<1x1xf32> to vector<8x1xf32>
    %32 = arith.addf %30, %31 : vector<8x1xf32>
    %c0_23 = arith.constant 0 : index
    %c0_24 = arith.constant 0 : index
    %33 = vector.load %arg10[%c0_23, %c0_24] : memref<8x1xf32, #tpu.memory_space<vmem>>, vector<8x1xf32>
    tpu.vector_store %arg10[%c0_23, %c0_24], %32 {strides = array<i32>} : memref<8x1xf32, #tpu.memory_space<vmem>>, vector<8x1xf32>,
    return
  }
  func.func @transform_0(%arg0: i32) -> (i32, i32) {
    %c0_i32 = arith.constant 0 : i32
    %c0_i32_0 = arith.constant 0 : i32
    return %arg0, %c0_i32 : i32, i32
  }
  func.func @transform_1(%arg0: i32) -> (i32, i32) {
    %c0_i32 = arith.constant 0 : i32
    %c0_i32_0 = arith.constant 0 : i32
    %c0_i32_1 = arith.constant 0 : i32
    return %c0_i32, %c0_i32_0 : i32, i32
  }
  func.func @transform_2(%arg0: i32) -> (i32, i32) {
    %c0_i32 = arith.constant 0 : i32
    %c0_i32_0 = arith.constant 0 : i32
    %c0_i32_1 = arith.constant 0 : i32
    return %c0_i32, %c0_i32_0 : i32, i32
  }
  func.func @transform_3(%arg0: i32) -> (i32, i32) {
    %c0_i32 = arith.constant 0 : i32
    %c0_i32_0 = arith.constant 0 : i32
    %c0_i32_1 = arith.constant 0 : i32
    return %c0_i32, %c0_i32_0 : i32, i32
  }
  func.func @transform_4(%arg0: i32) -> (i32, i32) {
    %c0_i32 = arith.constant 0 : i32
    %c0_i32_0 = arith.constant 0 : i32
    %c0_i32_1 = arith.constant 0 : i32
    return %c0_i32, %c0_i32_0 : i32, i32
  }
  func.func @transform_5(%arg0: i32) -> (i32, i32) {
    %c0_i32 = arith.constant 0 : i32
    %c0_i32_0 = arith.constant 0 : i32
    %c0_i32_1 = arith.constant 0 : i32
    return %c0_i32, %c0_i32_0 : i32, i32
  }
  func.func @transform_6(%arg0: i32) -> (i32, i32) {
    %c0_i32 = arith.constant 0 : i32
    %c0_i32_0 = arith.constant 0 : i32
    %c0_i32_1 = arith.constant 0 : i32
    return %c0_i32, %c0_i32_0 : i32, i32
  }
  func.func @transform_7(%arg0: i32) -> (i32, i32) {
    %c0_i32 = arith.constant 0 : i32
    %c0_i32_0 = arith.constant 0 : i32
    %c0_i32_1 = arith.constant 0 : i32
    return %c0_i32, %c0_i32_0 : i32, i32
  }
  func.func @transform_8(%arg0: i32) -> (i32, i32) {
    %c0_i32 = arith.constant 0 : i32
    %c0_i32_0 = arith.constant 0 : i32
    %c0_i32_1 = arith.constant 0 : i32
    return %c0_i32, %c0_i32_0 : i32, i32
  }
  func.func @transform_9(%arg0: i32) -> (i32, i32) {
    %c0_i32 = arith.constant 0 : i32
    %c0_i32_0 = arith.constant 0 : i32
    return %arg0, %c0_i32 : i32, i32
  }
}

module attributes {stable_mosaic.version = 11 : i64} {
  func.func @_mlp_kernel(%arg0: i32, %arg1: memref<8x16xf32, #tpu.memory_space<vmem>>, %arg2: memref<16x32xbf16, #tpu.memory_space<vmem>>, %arg3: memref<1x32xf32, #tpu.memory_space<vmem>>, %arg4: memref<32x32xbf16, #tpu.memory_space<vmem>>, %arg5: memref<1x32xf32, #tpu.memory_space<vmem>>, %arg6: memref<32x32xbf16, #tpu.memory_space<vmem>>, %arg7: memref<1x32xf32, #tpu.memory_space<vmem>>, %arg8: memref<1x32xf32, #tpu.memory_space<vmem>>, %arg9: memref<1x1xf32, #tpu.memory_space<vmem>>, %arg10: memref<8x1xf32, #tpu.memory_space<vmem>>) attributes {dimension_semantics = [#tpu.dimension_semantics<parallel>], iteration_bounds = array<i64: 1>, scalar_prefetch = 0 : i64, scratch_operands = 0 : i64, tpu.core_type = #tpu.core_type<tc>, window_params = [{transform_indices = @transform_0, window_bounds = array<i64: 8, 16>}, {pipeline_mode = #tpu.pipeline_mode<synchronous>, transform_indices = @transform_1, window_bounds = array<i64: 16, 32>}, {pipeline_mode = #tpu.pipeline_mode<synchronous>, transform_indices = @transform_2, window_bounds = array<i64: 1, 32>}, {pipeline_mode = #tpu.pipeline_mode<synchronous>, transform_indices = @transform_3, window_bounds = array<i64: 32, 32>}, {pipeline_mode = #tpu.pipeline_mode<synchronous>, transform_indices = @transform_4, window_bounds = array<i64: 1, 32>}, {pipeline_mode = #tpu.pipeline_mode<synchronous>, transform_indices = @transform_5, window_bounds = array<i64: 32, 32>}, {pipeline_mode = #tpu.pipeline_mode<synchronous>, transform_indices = @transform_6, window_bounds = array<i64: 1, 32>}, {pipeline_mode = #tpu.pipeline_mode<synchronous>, transform_indices = @transform_7, window_bounds = array<i64: 1, 32>}, {pipeline_mode = #tpu.pipeline_mode<synchronous>, transform_indices = @transform_8, window_bounds = array<i64: 1, 1>}, {transform_indices = @transform_9, window_bounds = array<i64: 8, 1>}]} {
    %c0 = arith.constant 0 : index
    %c0_0 = arith.constant 0 : index
    %0 = vector.load %arg1[%c0, %c0_0] : memref<8x16xf32, #tpu.memory_space<vmem>>, vector<8x16xf32>
    %c0_1 = arith.constant 0 : index
    %c0_2 = arith.constant 0 : index
    %1 = vector.load %arg2[%c0_1, %c0_2] : memref<16x32xbf16, #tpu.memory_space<vmem>>, vector<16x32xbf16>
    %c0_3 = arith.constant 0 : index
    %c0_4 = arith.constant 0 : index
    %2 = vector.load %arg3[%c0_3, %c0_4] : memref<1x32xf32, #tpu.memory_space<vmem>>, vector<1x32xf32>
    %3 = arith.truncf %0 : vector<8x16xf32> to vector<8x16xbf16>
    %cst = arith.constant dense<0.000000e+00> : vector<8x32xf32>
    %4 = tpu.matmul %3, %1, %cst {dimension_numbers = #tpu.dot_dimension_numbers<[1], [0], [0], [1], [0, 0, 1, 1], [], []>} : vector<8x16xbf16>, vector<16x32xbf16>, vector<8x32xf32> -> vector<8x32xf32>
    %5 = vector.broadcast %2 : vector<1x32xf32> to vector<8x32xf32>
    %6 = arith.addf %4, %5 : vector<8x32xf32>
    %cst_5 = arith.constant 0.000000e+00 : f32
    %7 = vector.broadcast %cst_5 : f32 to vector<8x32xf32>
    %8 = arith.maximumf %6, %7 : vector<8x32xf32>
    %c0_6 = arith.constant 0 : index
    %c0_7 = arith.constant 0 : index
    %9 = vector.load %arg4[%c0_6, %c0_7] : memref<32x32xbf16, #tpu.memory_space<vmem>>, vector<32x32xbf16>
    %c0_8 = arith.constant 0 : index
    %c0_9 = arith.constant 0 : index
    %10 = vector.load %arg5[%c0_8, %c0_9] : memref<1x32xf32, #tpu.memory_space<vmem>>, vector<1x32xf32>
    %11 = arith.truncf %8 : vector<8x32xf32> to vector<8x32xbf16>
    %cst_10 = arith.constant dense<0.000000e+00> : vector<8x32xf32>
    %12 = tpu.matmul %11, %9, %cst_10 {dimension_numbers = #tpu.dot_dimension_numbers<[1], [0], [0], [1], [0, 0, 1, 1], [], []>} : vector<8x32xbf16>, vector<32x32xbf16>, vector<8x32xf32> -> vector<8x32xf32>
    %13 = vector.broadcast %10 : vector<1x32xf32> to vector<8x32xf32>
    %14 = arith.addf %12, %13 : vector<8x32xf32>
    %cst_11 = arith.constant 0.000000e+00 : f32
    %15 = vector.broadcast %cst_11 : f32 to vector<8x32xf32>
    %16 = arith.maximumf %14, %15 : vector<8x32xf32>
    %c0_12 = arith.constant 0 : index
    %c0_13 = arith.constant 0 : index
    %17 = vector.load %arg6[%c0_12, %c0_13] : memref<32x32xbf16, #tpu.memory_space<vmem>>, vector<32x32xbf16>
    %c0_14 = arith.constant 0 : index
    %c0_15 = arith.constant 0 : index
    %18 = vector.load %arg7[%c0_14, %c0_15] : memref<1x32xf32, #tpu.memory_space<vmem>>, vector<1x32xf32>
    %19 = arith.truncf %16 : vector<8x32xf32> to vector<8x32xbf16>
    %cst_16 = arith.constant dense<0.000000e+00> : vector<8x32xf32>
    %20 = tpu.matmul %19, %17, %cst_16 {dimension_numbers = #tpu.dot_dimension_numbers<[1], [0], [0], [1], [0, 0, 1, 1], [], []>} : vector<8x32xbf16>, vector<32x32xbf16>, vector<8x32xf32> -> vector<8x32xf32>
    %21 = vector.broadcast %18 : vector<1x32xf32> to vector<8x32xf32>
    %22 = arith.addf %20, %21 : vector<8x32xf32>
    %cst_17 = arith.constant 0.000000e+00 : f32
    %23 = vector.broadcast %cst_17 : f32 to vector<8x32xf32>
    %24 = arith.maximumf %22, %23 : vector<8x32xf32>
    %c0_18 = arith.constant 0 : index
    %c0_19 = arith.constant 0 : index
    %25 = vector.load %arg8[%c0_18, %c0_19] : memref<1x32xf32, #tpu.memory_space<vmem>>, vector<1x32xf32>
    %c0_20 = arith.constant 0 : index
    %c0_21 = arith.constant 0 : index
    %26 = vector.load %arg9[%c0_20, %c0_21] : memref<1x1xf32, #tpu.memory_space<vmem>>, vector<1x1xf32>
    %27 = vector.broadcast %25 : vector<1x32xf32> to vector<8x32xf32>
    %28 = arith.mulf %24, %27 : vector<8x32xf32>
    %cst_22 = arith.constant dense<0.000000e+00> : vector<8xf32>
    %29 = vector.multi_reduction <add>, %28, %cst_22 [1] : vector<8x32xf32> to vector<8xf32>
    %30 = vector.shape_cast %29 : vector<8xf32> to vector<8x1xf32>
    %31 = vector.broadcast %26 : vector<1x1xf32> to vector<8x1xf32>
    %32 = arith.addf %30, %31 : vector<8x1xf32>
    %c0_23 = arith.constant 0 : index
    %c0_24 = arith.constant 0 : index
    %33 = vector.load %arg10[%c0_23, %c0_24] : memref<8x1xf32, #tpu.memory_space<vmem>>, vector<8x1xf32>
    tpu.vector_store %arg10[%c0_23, %c0_24], %32 {strides = array<i32>} : memref<8x1xf32, #tpu.memory_space<vmem>>, vector<8x1xf32>,
    return
  }
  func.func @transform_0(%arg0: i32) -> (i32, i32) {
    %c0_i32 = arith.constant 0 : i32
    %c0_i32_0 = arith.constant 0 : i32
    return %arg0, %c0_i32 : i32, i32
  }
  func.func @transform_1(%arg0: i32) -> (i32, i32) {
    %c0_i32 = arith.constant 0 : i32
    %c0_i32_0 = arith.constant 0 : i32
    %c0_i32_1 = arith.constant 0 : i32
    return %c0_i32, %c0_i32_0 : i32, i32
  }
  func.func @transform_2(%arg0: i32) -> (i32, i32) {
    %c0_i32 = arith.constant 0 : i32
    %c0_i32_0 = arith.constant 0 : i32
    %c0_i32_1 = arith.constant 0 : i32
    return %c0_i32, %c0_i32_0 : i32, i32
  }
  func.func @transform_3(%arg0: i32) -> (i32, i32) {
    %c0_i32 = arith.constant 0 : i32
    %c0_i32_0 = arith.constant 0 : i32
    %c0_i32_1 = arith.constant 0 : i32
    return %c0_i32, %c0_i32_0 : i32, i32
  }
  func.func @transform_4(%arg0: i32) -> (i32, i32) {
    %c0_i32 = arith.constant 0 : i32
    %c0_i32_0 = arith.constant 0 : i32
    %c0_i32_1 = arith.constant 0 : i32
    return %c0_i32, %c0_i32_0 : i32, i32
  }
  func.func @transform_5(%arg0: i32) -> (i32, i32) {
    %c0_i32 = arith.constant 0 : i32
    %c0_i32_0 = arith.constant 0 : i32
    %c0_i32_1 = arith.constant 0 : i32
    return %c0_i32, %c0_i32_0 : i32, i32
  }
  func.func @transform_6(%arg0: i32) -> (i32, i32) {
    %c0_i32 = arith.constant 0 : i32
    %c0_i32_0 = arith.constant 0 : i32
    %c0_i32_1 = arith.constant 0 : i32
    return %c0_i32, %c0_i32_0 : i32, i32
  }
  func.func @transform_7(%arg0: i32) -> (i32, i32) {
    %c0_i32 = arith.constant 0 : i32
    %c0_i32_0 = arith.constant 0 : i32
    %c0_i32_1 = arith.constant 0 : i32
    return %c0_i32, %c0_i32_0 : i32, i32
  }
  func.func @transform_8(%arg0: i32) -> (i32, i32) {
    %c0_i32 = arith.constant 0 : i32
    %c0_i32_0 = arith.constant 0 : i32
    %c0_i32_1 = arith.constant 0 : i32
    return %c0_i32, %c0_i32_0 : i32, i32
  }
  func.func @transform_9(%arg0: i32) -> (i32, i32) {
    %c0_i32 = arith.constant 0 : i32
    %c0_i32_0 = arith.constant 0 : i32
    return %arg0, %c0_i32 : i32, i32
  }
}

</mosaic_0001>

<llo_original>
// kernel: tpu_custom_call.1
$region0: #{tpu_custom_call.1}
  #allocation0 [shape = 'u32[]', space=smem, size = 0x4, offset = 0x4, fixed_abs, tag = 'smem constant byte address 0x4 - core index']
  #allocation1 [shape = 'u32[144,128]{1,0:T(1,128)}', space=vmem, size = 0x12000, scoped, tag = 'internal scratch']
  #allocation2 [shape = 'f32[1,1]{1,0:T(1,128)S(1)}', space=vmem, size = 0x200, scoped, tag = 'scoped memory for tpu_custom_call.1']
  %s0 = inlined_call_operand.hbm [shape: f32[8,16], index: 0, kind: input, shape index: {}]
  %s1 = inlined_call_operand.hbm [shape: bf16[16,32], index: 1, kind: input, shape index: {}]
  %s2 = inlined_call_operand.vmem [shape: f32[1,32], index: 2, kind: input, shape index: {}]
  %s3 = inlined_call_operand.hbm [shape: bf16[32,32], index: 3, kind: input, shape index: {}]
  %s4 = inlined_call_operand.vmem [shape: f32[1,32], index: 4, kind: input, shape index: {}]
  %s5 = inlined_call_operand.hbm [shape: bf16[32,32], index: 5, kind: input, shape index: {}]
  %s6 = inlined_call_operand.vmem [shape: f32[1,32], index: 6, kind: input, shape index: {}]
  %s7 = inlined_call_operand.vmem [shape: f32[1,32], index: 7, kind: input, shape index: {}]
  %s8 = inlined_call_operand.<no memory space> [shape: f32[1,1], index: 8, kind: input, shape index: {}]
  %s9 = inlined_call_operand.vmem [shape: f32[8,1], index: 9, kind: output, shape index: {}]
  %s10 = sld [smem:[#allocation0]]
  $region62: #{tpu_custom_call.1} parent=0
    _
  %s12 = ssub.s32 1, %s10
  %s13 = scalar_select 0, %s12, %s10
  %v14 = vstv %s8
  %15 = vst [vmem:[#allocation2] sm:$0x1] %v14
  $region1: #{tpu_custom_call.1} parent=0
    #allocation3 [shape = 'u8[4096]{0}', space=vmem, size = 0x1000, scoped, tag = 'input window, operand 0, single buffered']
    #allocation4 [shape = 's32[1]{0}', space=sflag, size = 0x4, scoped, tag = 'scoped memory for tpu_custom_call.1']
    #allocation5 [shape = 'u8[4096]{0}', space=vmem, size = 0x1000, scoped, tag = 'input window, operand 1, single buffered']
    #allocation6 [shape = 's32[1]{0}', space=sflag, size = 0x4, scoped, tag = 'scoped memory for tpu_custom_call.1']
    #allocation7 [shape = 'u8[8192]{0}', space=vmem, size = 0x2000, scoped, tag = 'input window, operand 3, single buffered']
    #allocation8 [shape = 'u8[8192]{0}', space=vmem, size = 0x2000, scoped, tag = 'input window, operand 5, single buffered']
    #allocation9 [shape = 's32[1]{0}', space=sflag, size = 0x4, scoped, tag = 'scoped memory for tpu_custom_call.1']
    %16 = vsyncpa [#allocation4], 0
    %17 = vsyncpa [#allocation6], 0
    %18 = vsyncpa [#allocation9], 0
    // Predicated region
    $region2: #{tpu_custom_call.1} parent=1 // pred_check
      _
    $region3: #{tpu_custom_call.1} parent=1 // pred_check_branch
      %20 = sbr.rel (0) target = $region5
    $region4: #{tpu_custom_call.1} parent=1 // pred_region
      %s22 = ssub.s32 128, 128
      %23 = vsyncadd [#allocation4], %s22
      %s25 = sshll.u32 [#allocation3], 4
      %s26 = int_to_ptr.vmem [resolvable:$true] %s25
      %28 = dma.hbm_to_vmem [thread:$0]  %s0, 128, %s26, [#allocation4]
    $region5: #{tpu_custom_call.1} parent=1 // pred_fallthru
      _
    // Predicated region
    $region6: #{tpu_custom_call.1} parent=1 // pred_check
      _
    $region7: #{tpu_custom_call.1} parent=1 // pred_check_branch
      %30 = sbr.rel (0) target = $region9
    $region8: #{tpu_custom_call.1} parent=1 // pred_region
      %s32 = ssub.s32 128, 128
      %33 = vsyncadd [#allocation6], %s32
      %s34 = sshll.u32 [#allocation5], 4
      %s35 = int_to_ptr.vmem [resolvable:$true] %s34
      %40 = dma.hbm_to_vmem [thread:$0]  %s1, 128, %s35, [#allocation6], 64, 64, 4
    $region9: #{tpu_custom_call.1} parent=1 // pred_fallthru
      _
    // Predicated region
    $region10: #{tpu_custom_call.1} parent=1 // pred_check
      _
    $region11: #{tpu_custom_call.1} parent=1 // pred_check_branch
      %42 = sbr.rel (0) target = $region13
    $region12: #{tpu_custom_call.1} parent=1 // pred_region
      _
    $region13: #{tpu_custom_call.1} parent=1 // pred_fallthru
      _
    // Predicated region
    $region14: #{tpu_custom_call.1} parent=1 // pred_check
      _
    $region15: #{tpu_custom_call.1} parent=1 // pred_check_branch
      %44 = sbr.rel (0) target = $region17
    $region16: #{tpu_custom_call.1} parent=1 // pred_region
      %s46 = ssub.s32 256, 256
      %47 = vsyncadd [#allocation6], %s46
      %s48 = sshll.u32 [#allocation7], 4
      %s49 = int_to_ptr.vmem [resolvable:$true] %s48
      %54 = dma.hbm_to_vmem [thread:$0]  %s3, 256, %s49, [#allocation6], 64, 64, 4
    $region17: #{tpu_custom_call.1} parent=1 // pred_fallthru
      _
    // Predicated region
    $region18: #{tpu_custom_call.1} parent=1 // pred_check
      _
    $region19: #{tpu_custom_call.1} parent=1 // pred_check_branch
      %56 = sbr.rel (0) target = $region21
    $region20: #{tpu_custom_call.1} parent=1 // pred_region
      _
    $region21: #{tpu_custom_call.1} parent=1 // pred_fallthru
      _
    // Predicated region
    $region22: #{tpu_custom_call.1} parent=1 // pred_check
      _
    $region23: #{tpu_custom_call.1} parent=1 // pred_check_branch
      %58 = sbr.rel (0) target = $region25
    $region24: #{tpu_custom_call.1} parent=1 // pred_region
      %s60 = ssub.s32 256, 256
      %61 = vsyncadd [#allocation9], %s60
      %s62 = sshll.u32 [#allocation8], 4
      %s63 = int_to_ptr.vmem [resolvable:$true] %s62
      %68 = dma.hbm_to_vmem [thread:$0]  %s5, 256, %s63, [#allocation9], 64, 64, 4
    $region25: #{tpu_custom_call.1} parent=1 // pred_fallthru
      _
    // Predicated region
    $region26: #{tpu_custom_call.1} parent=1 // pred_check
      _
    $region27: #{tpu_custom_call.1} parent=1 // pred_check_branch
      %70 = sbr.rel (0) target = $region29
    $region28: #{tpu_custom_call.1} parent=1 // pred_region
      _
    $region29: #{tpu_custom_call.1} parent=1 // pred_fallthru
      _
    // Predicated region
    $region30: #{tpu_custom_call.1} parent=1 // pred_check
      _
    $region31: #{tpu_custom_call.1} parent=1 // pred_check_branch
      %72 = sbr.rel (0) target = $region33
    $region32: #{tpu_custom_call.1} parent=1 // pred_region
      _
    $region33: #{tpu_custom_call.1} parent=1 // pred_fallthru
      _
    // Predicated region
    $region34: #{tpu_custom_call.1} parent=1 // pred_check
      _
    $region35: #{tpu_custom_call.1} parent=1 // pred_check_branch
      %74 = sbr.rel (0) target = $region37
    $region36: #{tpu_custom_call.1} parent=1 // pred_region
      _
    $region37: #{tpu_custom_call.1} parent=1 // pred_fallthru
      _
    // Predicated region
    $region38: #{tpu_custom_call.1} parent=1 // pred_check
      _
    $region39: #{tpu_custom_call.1} parent=1 // pred_check_branch
      %76 = sbr.rel (0) target = $region41
    $region40: #{tpu_custom_call.1} parent=1 // pred_region
      %77 = dma.done [#allocation4], 128
    $region41: #{tpu_custom_call.1} parent=1 // pred_fallthru
      _
    // Predicated region
    $region42: #{tpu_custom_call.1} parent=1 // pred_check
      _
    $region43: #{tpu_custom_call.1} parent=1 // pred_check_branch
      %79 = sbr.rel (0) target = $region45
    $region44: #{tpu_custom_call.1} parent=1 // pred_region
      %80 = dma.done [#allocation6], 128
    $region45: #{tpu_custom_call.1} parent=1 // pred_fallthru
      _
    // Predicated region
    $region46: #{tpu_custom_call.1} parent=1 // pred_check
      _
    $region47: #{tpu_custom_call.1} parent=1 // pred_check_branch
      %82 = sbr.rel (0) target = $region49
    $region48: #{tpu_custom_call.1} parent=1 // pred_region
      %83 = dma.done [#allocation6], 256
    $region49: #{tpu_custom_call.1} parent=1 // pred_fallthru
      _
    // Predicated region
    $region50: #{tpu_custom_call.1} parent=1 // pred_check
      _
    $region51: #{tpu_custom_call.1} parent=1 // pred_check_branch
      %85 = sbr.rel (0) target = $region53
    $region52: #{tpu_custom_call.1} parent=1 // pred_region
      %86 = dma.done [#allocation9], 256
    $region53: #{tpu_custom_call.1} parent=1 // pred_fallthru
      _
    %v88 = vld [vmem:[#allocation3] sm:$0xff]
    %v89 = vld [vmem:[#allocation5] sm:$0xf]
    %v90 = vld [vmem:[#allocation5 + $0x4] sm:$0xf]
    %v91 = vld [vmem:[%s2] sm:$0x1]
    %v92 = vpack.c.bf16 %v88, %v88
    %v94 = vlaneseq
    %v95 = vshrl.u32 %v94, 7
    %v96 = vsub.s32 0, %v95
    %v97 = vrot.slane %v91, %v96
    %v101 = vunpack.c.l.b16 %v89
    %v102 = vunpack.c.l.b16 %v90
    %v103 = vpack.c.b16 %v102, %v101
    %vm105 = vcmask 130048
    %v107 = vsel %vm105, %v92, 0
    %109 = vmatprep.subr.bf16.mxu0 0
    %110 = vmatpush1.bf16.msra.mxu0 0
    %111 = vmatprep.subr.bf16.mxu0 0
    %112 = vmatpush1.bf16.msra.mxu0 0
    %113 = vmatprep.subr.bf16.mxu0 0
    %114 = vmatpush1.bf16.msra.mxu0 0
    %115 = vmatprep.subr.bf16.mxu0 0
    %116 = vmatpush1.bf16.msra.mxu0 0
    %117 = vmatprep.subr.bf16.mxu0 0
    %118 = vmatpush1.bf16.msra.mxu0 0
    %119 = vmatprep.subr.bf16.mxu0 0
    %120 = vmatpush1.bf16.msra.mxu0 0
    %121 = vmatprep.subr.bf16.mxu0 0
    %122 = vmatpush1.bf16.msra.mxu0 0
    %123 = vmatprep.subr.bf16.mxu0 0
    %124 = vmatpush1.bf16.msra.mxu0 %v103
    %125 = vmatprep.subr.bf16.mxu0 0
    %126 = vmatpush2.bf16.msra.mxu0 0
    %127 = vmatprep.subr.bf16.mxu0 0
    %128 = vmatpush2.bf16.msra.mxu0 0
    %129 = vmatprep.subr.bf16.mxu0 0
    %130 = vmatpush2.bf16.msra.mxu0 0
    %131 = vmatprep.subr.bf16.mxu0 0
    %132 = vmatpush2.bf16.msra.mxu0 0
    %133 = vmatprep.subr.bf16.mxu0 0
    %134 = vmatpush2.bf16.msra.mxu0 0
    %135 = vmatprep.subr.bf16.mxu0 0
    %136 = vmatpush2.bf16.msra.mxu0 0
    %137 = vmatprep.subr.bf16.mxu0 0
    %138 = vmatpush2.bf16.msra.mxu0 0
    %139 = vmatprep.subr.bf16.mxu0 0
    %140 = vmatpush2.bf16.msra.mxu0 0
    %141 = vmatprep.mubr.bf16.mxu0 0
    %142 = vmatmul.mubr.bf16.gmra.mxu0 %v107
    %v143 = vpop.f32.mrf.mxu0
    %v144 = vadd.f32 %v97, %v143
    %v145 = vpop.f32.mrf.mxu0
    %v146 = vpop.f32.mrf.mxu0
    %v147 = vpop.f32.mrf.mxu0
    %148 = vdwg.mxu0
    %v149 = vmax.f32 %v144, 0.0
    %v150 = vld [vmem:[#allocation7] sm:$0xf]
    %v151 = vld [vmem:[#allocation7 + $0x4] sm:$0xf]
    %v152 = vld [vmem:[#allocation7 + $0x8] sm:$0xf]
    %v153 = vld [vmem:[#allocation7 + $0xc] sm:$0xf]
    %v154 = vld [vmem:[%s4] sm:$0x1]
    %v155 = vpack.c.bf16 %v149, %v149
    %v157 = vlaneseq
    %v158 = vshrl.u32 %v157, 7
    %v159 = vsub.s32 0, %v158
    %v160 = vrot.slane %v154, %v159
    %v166 = vunpack.c.l.b16 %v150
    %v167 = vunpack.c.l.b16 %v151
    %v168 = vunpack.c.l.b16 %v152
    %v169 = vunpack.c.l.b16 %v153
    %v170 = vpack.c.b16 %v167, %v166
    %v171 = vpack.c.b16 %v169, %v168
    %vm174 = vcmask 261120
    %v176 = vsel %vm174, %v155, 0
    %178 = vmatprep.subr.bf16.mxu0 0
    %179 = vmatpush1.bf16.msra.mxu0 0
    %180 = vmatprep.subr.bf16.mxu0 0
    %181 = vmatpush1.bf16.msra.mxu0 0
    %182 = vmatprep.subr.bf16.mxu0 0
    %183 = vmatpush1.bf16.msra.mxu0 0
    %184 = vmatprep.subr.bf16.mxu0 0
    %185 = vmatpush1.bf16.msra.mxu0 0
    %186 = vmatprep.subr.bf16.mxu0 0
    %187 = vmatpush1.bf16.msra.mxu0 0
    %188 = vmatprep.subr.bf16.mxu0 0
    %189 = vmatpush1.bf16.msra.mxu0 0
    %190 = vmatprep.subr.bf16.mxu0 0
    %191 = vmatpush1.bf16.msra.mxu0 %v171
    %192 = vmatprep.subr.bf16.mxu0 0
    %193 = vmatpush1.bf16.msra.mxu0 %v170
    %194 = vmatprep.subr.bf16.mxu0 0
    %195 = vmatpush2.bf16.msra.mxu0 0
    %196 = vmatprep.subr.bf16.mxu0 0
    %197 = vmatpush2.bf16.msra.mxu0 0
    %198 = vmatprep.subr.bf16.mxu0 0
    %199 = vmatpush2.bf16.msra.mxu0 0
    %200 = vmatprep.subr.bf16.mxu0 0
    %201 = vmatpush2.bf16.msra.mxu0 0
    %202 = vmatprep.subr.bf16.mxu0 0
    %203 = vmatpush2.bf16.msra.mxu0 0
    %204 = vmatprep.subr.bf16.mxu0 0
    %205 = vmatpush2.bf16.msra.mxu0 0
    %206 = vmatprep.subr.bf16.mxu0 0
    %207 = vmatpush2.bf16.msra.mxu0 0
    %208 = vmatprep.subr.bf16.mxu0 0
    %209 = vmatpush2.bf16.msra.mxu0 0
    %210 = vmatprep.mubr.bf16.mxu0 0
    %211 = vmatmul.mubr.bf16.gmra.mxu0 %v176
    %v212 = vpop.f32.mrf.mxu0
    %v213 = vadd.f32 %v160, %v212
    %v214 = vpop.f32.mrf.mxu0
    %v215 = vpop.f32.mrf.mxu0
    %v216 = vpop.f32.mrf.mxu0
    %217 = vdwg.mxu0
    %v218 = vmax.f32 %v213, 0.0
    %v219 = vld [vmem:[#allocation8] sm:$0xf]
    %v220 = vld [vmem:[#allocation8 + $0x4] sm:$0xf]
    %v221 = vld [vmem:[#allocation8 + $0x8] sm:$0xf]
    %v222 = vld [vmem:[#allocation8 + $0xc] sm:$0xf]
    %v223 = vld [vmem:[%s6] sm:$0x1]
    %v224 = vpack.c.bf16 %v218, %v218
    %v226 = vlaneseq
    %v227 = vshrl.u32 %v226, 7
    %v228 = vsub.s32 0, %v227
    %v229 = vrot.slane %v223, %v228
    %v235 = vunpack.c.l.b16 %v219
    %v236 = vunpack.c.l.b16 %v220
    %v237 = vunpack.c.l.b16 %v221
    %v238 = vunpack.c.l.b16 %v222
    %v239 = vpack.c.b16 %v236, %v235
    %v240 = vpack.c.b16 %v238, %v237
    %v244 = vsel %vm174, %v224, 0
    %246 = vmatprep.subr.bf16.mxu0 0
    %247 = vmatpush1.bf16.msra.mxu0 0
    %248 = vmatprep.subr.bf16.mxu0 0
    %249 = vmatpush1.bf16.msra.mxu0 0
    %250 = vmatprep.subr.bf16.mxu0 0
    %251 = vmatpush1.bf16.msra.mxu0 0
    %252 = vmatprep.subr.bf16.mxu0 0
    %253 = vmatpush1.bf16.msra.mxu0 0
    %254 = vmatprep.subr.bf16.mxu0 0
    %255 = vmatpush1.bf16.msra.mxu0 0
    %256 = vmatprep.subr.bf16.mxu0 0
    %257 = vmatpush1.bf16.msra.mxu0 0
    %258 = vmatprep.subr.bf16.mxu0 0
    %259 = vmatpush1.bf16.msra.mxu0 %v240
    %260 = vmatprep.subr.bf16.mxu0 0
    %261 = vmatpush1.bf16.msra.mxu0 %v239
    %262 = vmatprep.subr.bf16.mxu0 0
    %263 = vmatpush2.bf16.msra.mxu0 0
    %264 = vmatprep.subr.bf16.mxu0 0
    %265 = vmatpush2.bf16.msra.mxu0 0
    %266 = vmatprep.subr.bf16.mxu0 0
    %267 = vmatpush2.bf16.msra.mxu0 0
    %268 = vmatprep.subr.bf16.mxu0 0
    %269 = vmatpush2.bf16.msra.mxu0 0
    %270 = vmatprep.subr.bf16.mxu0 0
    %271 = vmatpush2.bf16.msra.mxu0 0
    %272 = vmatprep.subr.bf16.mxu0 0
    %273 = vmatpush2.bf16.msra.mxu0 0
    %274 = vmatprep.subr.bf16.mxu0 0
    %275 = vmatpush2.bf16.msra.mxu0 0
    %276 = vmatprep.subr.bf16.mxu0 0
    %277 = vmatpush2.bf16.msra.mxu0 0
    %278 = vmatprep.mubr.bf16.mxu0 0
    %279 = vmatmul.mubr.bf16.gmra.mxu0 %v244
    %v280 = vpop.f32.mrf.mxu0
    %v281 = vadd.f32 %v229, %v280
    %v282 = vpop.f32.mrf.mxu0
    %v283 = vpop.f32.mrf.mxu0
    %v284 = vpop.f32.mrf.mxu0
    %285 = vdwg.mxu0
    %v286 = vmax.f32 %v281, 0.0
    %v287 = vld [vmem:[%s7] sm:$0x1]
    %v288 = vld [vmem:[#allocation2] sm:$0x1]
    %v290 = vlaneseq
    %v291 = vshrl.u32 %v290, 7
    %v292 = vsub.s32 0, %v291
    %v293 = vrot.slane %v287, %v292
    %v295 = vmul.f32 %v286, %v293
    %v296 = vsel %vm174, %v295, 0.0
    %297 = vadd.xlane.f32.xlu0 %v296
    %v298 = vpop.xlane.xlu0 %297
    %v300 = vlaneseq
    %v301 = vshrl.u32 %v300, 7
    %v302 = vsub.s32 0, %v301
    %v303 = vrot.slane %v288, %v302
    %v305 = vadd.f32 %v298, %v303
    %vm306 = vcmask 7168
    %307 = vst.msk [vmem:[%s9] sm:$0xff] %vm306, %v305
    // Predicated region
    $region54: #{tpu_custom_call.1} parent=1 // pred_check
      _
    $region55: #{tpu_custom_call.1} parent=1 // pred_check_branch
      %309 = sbr.rel (0) target = $region57
    $region56: #{tpu_custom_call.1} parent=1 // pred_region
      _
    $region57: #{tpu_custom_call.1} parent=1 // pred_fallthru
      _
    // Predicated region
    $region58: #{tpu_custom_call.1} parent=1 // pred_check
      _
    $region59: #{tpu_custom_call.1} parent=1 // pred_check_branch
      %311 = sbr.rel (0) target = $region61
    $region60: #{tpu_custom_call.1} parent=1 // pred_region
      _
    $region61: #{tpu_custom_call.1} parent=1 // pred_fallthru
      _
    %312 = vsyncpa [#allocation4], 1
    %313 = vsyncpa [#allocation6], 1
    %314 = vsyncpa [#allocation9], 1

// kernel: tpu_custom_call.1
$region0: #{tpu_custom_call.1}
  #allocation0 [shape = 'u32[]', space=smem, size = 0x4, offset = 0x4, fixed_abs, tag = 'smem constant byte address 0x4 - core index']
  #allocation1 [shape = 'u32[144,128]{1,0:T(1,128)}', space=vmem, size = 0x12000, scoped, tag = 'internal scratch']
  #allocation2 [shape = 'f32[1,1]{1,0:T(1,128)S(1)}', space=vmem, size = 0x200, scoped, tag = 'scoped memory for tpu_custom_call.1']
  %s0 = inlined_call_operand.hbm [shape: f32[8,16], index: 0, kind: input, shape index: {}]
  %s1 = inlined_call_operand.hbm [shape: bf16[16,32], index: 1, kind: input, shape index: {}]
  %s2 = inlined_call_operand.vmem [shape: f32[1,32], index: 2, kind: input, shape index: {}]
  %s3 = inlined_call_operand.hbm [shape: bf16[32,32], index: 3, kind: input, shape index: {}]
  %s4 = inlined_call_operand.vmem [shape: f32[1,32], index: 4, kind: input, shape index: {}]
  %s5 = inlined_call_operand.hbm [shape: bf16[32,32], index: 5, kind: input, shape index: {}]
  %s6 = inlined_call_operand.vmem [shape: f32[1,32], index: 6, kind: input, shape index: {}]
  %s7 = inlined_call_operand.vmem [shape: f32[1,32], index: 7, kind: input, shape index: {}]
  %s8 = inlined_call_operand.<no memory space> [shape: f32[1,1], index: 8, kind: input, shape index: {}]
  %s9 = inlined_call_operand.vmem [shape: f32[8,1], index: 9, kind: output, shape index: {}]
  %s10 = sld [smem:[#allocation0]]
  $region62: #{tpu_custom_call.1} parent=0
    _
  %s12 = ssub.s32 1, %s10
  %s13 = scalar_select 0, %s12, %s10
  %v14 = vstv %s8
  %15 = vst [vmem:[#allocation2] sm:$0x1] %v14
  $region1: #{tpu_custom_call.1} parent=0
    #allocation3 [shape = 'u8[4096]{0}', space=vmem, size = 0x1000, scoped, tag = 'input window, operand 0, single buffered']
    #allocation4 [shape = 's32[1]{0}', space=sflag, size = 0x4, scoped, tag = 'scoped memory for tpu_custom_call.1']
    #allocation5 [shape = 'u8[4096]{0}', space=vmem, size = 0x1000, scoped, tag = 'input window, operand 1, single buffered']
    #allocation6 [shape = 's32[1]{0}', space=sflag, size = 0x4, scoped, tag = 'scoped memory for tpu_custom_call.1']
    #allocation7 [shape = 'u8[8192]{0}', space=vmem, size = 0x2000, scoped, tag = 'input window, operand 3, single buffered']
    #allocation8 [shape = 'u8[8192]{0}', space=vmem, size = 0x2000, scoped, tag = 'input window, operand 5, single buffered']
    #allocation9 [shape = 's32[1]{0}', space=sflag, size = 0x4, scoped, tag = 'scoped memory for tpu_custom_call.1']
    %16 = vsyncpa [#allocation4], 0
    %17 = vsyncpa [#allocation6], 0
    %18 = vsyncpa [#allocation9], 0
    // Predicated region
    $region2: #{tpu_custom_call.1} parent=1 // pred_check
      _
    $region3: #{tpu_custom_call.1} parent=1 // pred_check_branch
      %20 = sbr.rel (0) target = $region5
    $region4: #{tpu_custom_call.1} parent=1 // pred_region
      %s22 = ssub.s32 128, 128
      %23 = vsyncadd [#allocation4], %s22
      %s25 = sshll.u32 [#allocation3], 4
      %s26 = int_to_ptr.vmem [resolvable:$true] %s25
      %28 = dma.hbm_to_vmem [thread:$0]  %s0, 128, %s26, [#allocation4]
    $region5: #{tpu_custom_call.1} parent=1 // pred_fallthru
      _
    // Predicated region
    $region6: #{tpu_custom_call.1} parent=1 // pred_check
      _
    $region7: #{tpu_custom_call.1} parent=1 // pred_check_branch
      %30 = sbr.rel (0) target = $region9
    $region8: #{tpu_custom_call.1} parent=1 // pred_region
      %s32 = ssub.s32 128, 128
      %33 = vsyncadd [#allocation6], %s32
      %s34 = sshll.u32 [#allocation5], 4
      %s35 = int_to_ptr.vmem [resolvable:$true] %s34
      %40 = dma.hbm_to_vmem [thread:$0]  %s1, 128, %s35, [#allocation6], 64, 64, 4
    $region9: #{tpu_custom_call.1} parent=1 // pred_fallthru
      _
    // Predicated region
    $region10: #{tpu_custom_call.1} parent=1 // pred_check
      _
    $region11: #{tpu_custom_call.1} parent=1 // pred_check_branch
      %42 = sbr.rel (0) target = $region13
    $region12: #{tpu_custom_call.1} parent=1 // pred_region
      _
    $region13: #{tpu_custom_call.1} parent=1 // pred_fallthru
      _
    // Predicated region
    $region14: #{tpu_custom_call.1} parent=1 // pred_check
      _
    $region15: #{tpu_custom_call.1} parent=1 // pred_check_branch
      %44 = sbr.rel (0) target = $region17
    $region16: #{tpu_custom_call.1} parent=1 // pred_region
      %s46 = ssub.s32 256, 256
      %47 = vsyncadd [#allocation6], %s46
      %s48 = sshll.u32 [#allocation7], 4
      %s49 = int_to_ptr.vmem [resolvable:$true] %s48
      %54 = dma.hbm_to_vmem [thread:$0]  %s3, 256, %s49, [#allocation6], 64, 64, 4
    $region17: #{tpu_custom_call.1} parent=1 // pred_fallthru
      _
    // Predicated region
    $region18: #{tpu_custom_call.1} parent=1 // pred_check
      _
    $region19: #{tpu_custom_call.1} parent=1 // pred_check_branch
      %56 = sbr.rel (0) target = $region21
    $region20: #{tpu_custom_call.1} parent=1 // pred_region
      _
    $region21: #{tpu_custom_call.1} parent=1 // pred_fallthru
      _
    // Predicated region
    $region22: #{tpu_custom_call.1} parent=1 // pred_check
      _
    $region23: #{tpu_custom_call.1} parent=1 // pred_check_branch
      %58 = sbr.rel (0) target = $region25
    $region24: #{tpu_custom_call.1} parent=1 // pred_region
      %s60 = ssub.s32 256, 256
      %61 = vsyncadd [#allocation9], %s60
      %s62 = sshll.u32 [#allocation8], 4
      %s63 = int_to_ptr.vmem [resolvable:$true] %s62
      %68 = dma.hbm_to_vmem [thread:$0]  %s5, 256, %s63, [#allocation9], 64, 64, 4
    $region25: #{tpu_custom_call.1} parent=1 // pred_fallthru
      _
    // Predicated region
    $region26: #{tpu_custom_call.1} parent=1 // pred_check
      _
    $region27: #{tpu_custom_call.1} parent=1 // pred_check_branch
      %70 = sbr.rel (0) target = $region29
    $region28: #{tpu_custom_call.1} parent=1 // pred_region
      _
    $region29: #{tpu_custom_call.1} parent=1 // pred_fallthru
      _
    // Predicated region
    $region30: #{tpu_custom_call.1} parent=1 // pred_check
      _
    $region31: #{tpu_custom_call.1} parent=1 // pred_check_branch
      %72 = sbr.rel (0) target = $region33
    $region32: #{tpu_custom_call.1} parent=1 // pred_region
      _
    $region33: #{tpu_custom_call.1} parent=1 // pred_fallthru
      _
    // Predicated region
    $region34: #{tpu_custom_call.1} parent=1 // pred_check
      _
    $region35: #{tpu_custom_call.1} parent=1 // pred_check_branch
      %74 = sbr.rel (0) target = $region37
    $region36: #{tpu_custom_call.1} parent=1 // pred_region
      _
    $region37: #{tpu_custom_call.1} parent=1 // pred_fallthru
      _
    // Predicated region
    $region38: #{tpu_custom_call.1} parent=1 // pred_check
      _
    $region39: #{tpu_custom_call.1} parent=1 // pred_check_branch
      %76 = sbr.rel (0) target = $region41
    $region40: #{tpu_custom_call.1} parent=1 // pred_region
      %77 = dma.done [#allocation4], 128
    $region41: #{tpu_custom_call.1} parent=1 // pred_fallthru
      _
    // Predicated region
    $region42: #{tpu_custom_call.1} parent=1 // pred_check
      _
    $region43: #{tpu_custom_call.1} parent=1 // pred_check_branch
      %79 = sbr.rel (0) target = $region45
    $region44: #{tpu_custom_call.1} parent=1 // pred_region
      %80 = dma.done [#allocation6], 128
    $region45: #{tpu_custom_call.1} parent=1 // pred_fallthru
      _
    // Predicated region
    $region46: #{tpu_custom_call.1} parent=1 // pred_check
      _
    $region47: #{tpu_custom_call.1} parent=1 // pred_check_branch
      %82 = sbr.rel (0) target = $region49
    $region48: #{tpu_custom_call.1} parent=1 // pred_region
      %83 = dma.done [#allocation6], 256
    $region49: #{tpu_custom_call.1} parent=1 // pred_fallthru
      _
    // Predicated region
    $region50: #{tpu_custom_call.1} parent=1 // pred_check
      _
    $region51: #{tpu_custom_call.1} parent=1 // pred_check_branch
      %85 = sbr.rel (0) target = $region53
    $region52: #{tpu_custom_call.1} parent=1 // pred_region
      %86 = dma.done [#allocation9], 256
    $region53: #{tpu_custom_call.1} parent=1 // pred_fallthru
      _
    %v88 = vld [vmem:[#allocation3] sm:$0xff]
    %v89 = vld [vmem:[#allocation5] sm:$0xf]
    %v90 = vld [vmem:[#allocation5 + $0x4] sm:$0xf]
    %v91 = vld [vmem:[%s2] sm:$0x1]
    %v92 = vpack.c.bf16 %v88, %v88
    %v94 = vlaneseq
    %v95 = vshrl.u32 %v94, 7
    %v96 = vsub.s32 0, %v95
    %v97 = vrot.slane %v91, %v96
    %v101 = vunpack.c.l.b16 %v89
    %v102 = vunpack.c.l.b16 %v90
    %v103 = vpack.c.b16 %v102, %v101
    %vm105 = vcmask 130048
    %v107 = vsel %vm105, %v92, 0
    %109 = vmatprep.subr.bf16.mxu0 0
    %110 = vmatpush1.bf16.msra.mxu0 0
    %111 = vmatprep.subr.bf16.mxu0 0
    %112 = vmatpush1.bf16.msra.mxu0 0
    %113 = vmatprep.subr.bf16.mxu0 0
    %114 = vmatpush1.bf16.msra.mxu0 0
    %115 = vmatprep.subr.bf16.mxu0 0
    %116 = vmatpush1.bf16.msra.mxu0 0
    %117 = vmatprep.subr.bf16.mxu0 0
    %118 = vmatpush1.bf16.msra.mxu0 0
    %119 = vmatprep.subr.bf16.mxu0 0
    %120 = vmatpush1.bf16.msra.mxu0 0
    %121 = vmatprep.subr.bf16.mxu0 0
    %122 = vmatpush1.bf16.msra.mxu0 0
    %123 = vmatprep.subr.bf16.mxu0 0
    %124 = vmatpush1.bf16.msra.mxu0 %v103
    %125 = vmatprep.subr.bf16.mxu0 0
    %126 = vmatpush2.bf16.msra.mxu0 0
    %127 = vmatprep.subr.bf16.mxu0 0
    %128 = vmatpush2.bf16.msra.mxu0 0
    %129 = vmatprep.subr.bf16.mxu0 0
    %130 = vmatpush2.bf16.msra.mxu0 0
    %131 = vmatprep.subr.bf16.mxu0 0
    %132 = vmatpush2.bf16.msra.mxu0 0
    %133 = vmatprep.subr.bf16.mxu0 0
    %134 = vmatpush2.bf16.msra.mxu0 0
    %135 = vmatprep.subr.bf16.mxu0 0
    %136 = vmatpush2.bf16.msra.mxu0 0
    %137 = vmatprep.subr.bf16.mxu0 0
    %138 = vmatpush2.bf16.msra.mxu0 0
    %139 = vmatprep.subr.bf16.mxu0 0
    %140 = vmatpush2.bf16.msra.mxu0 0
    %141 = vmatprep.mubr.bf16.mxu0 0
    %142 = vmatmul.mubr.bf16.gmra.mxu0 %v107
    %v143 = vpop.f32.mrf.mxu0
    %v144 = vadd.f32 %v97, %v143
    %v145 = vpop.f32.mrf.mxu0
    %v146 = vpop.f32.mrf.mxu0
    %v147 = vpop.f32.mrf.mxu0
    %148 = vdwg.mxu0
    %v149 = vmax.f32 %v144, 0.0
    %v150 = vld [vmem:[#allocation7] sm:$0xf]
    %v151 = vld [vmem:[#allocation7 + $0x4] sm:$0xf]
    %v152 = vld [vmem:[#allocation7 + $0x8] sm:$0xf]
    %v153 = vld [vmem:[#allocation7 + $0xc] sm:$0xf]
    %v154 = vld [vmem:[%s4] sm:$0x1]
    %v155 = vpack.c.bf16 %v149, %v149
    %v157 = vlaneseq
    %v158 = vshrl.u32 %v157, 7
    %v159 = vsub.s32 0, %v158
    %v160 = vrot.slane %v154, %v159
    %v166 = vunpack.c.l.b16 %v150
    %v167 = vunpack.c.l.b16 %v151
    %v168 = vunpack.c.l.b16 %v152
    %v169 = vunpack.c.l.b16 %v153
    %v170 = vpack.c.b16 %v167, %v166
    %v171 = vpack.c.b16 %v169, %v168
    %vm174 = vcmask 261120
    %v176 = vsel %vm174, %v155, 0
    %178 = vmatprep.subr.bf16.mxu0 0
    %179 = vmatpush1.bf16.msra.mxu0 0
    %180 = vmatprep.subr.bf16.mxu0 0
    %181 = vmatpush1.bf16.msra.mxu0 0
    %182 = vmatprep.subr.bf16.mxu0 0
    %183 = vmatpush1.bf16.msra.mxu0 0
    %184 = vmatprep.subr.bf16.mxu0 0
    %185 = vmatpush1.bf16.msra.mxu0 0
    %186 = vmatprep.subr.bf16.mxu0 0
    %187 = vmatpush1.bf16.msra.mxu0 0
    %188 = vmatprep.subr.bf16.mxu0 0
    %189 = vmatpush1.bf16.msra.mxu0 0
    %190 = vmatprep.subr.bf16.mxu0 0
    %191 = vmatpush1.bf16.msra.mxu0 %v171
    %192 = vmatprep.subr.bf16.mxu0 0
    %193 = vmatpush1.bf16.msra.mxu0 %v170
    %194 = vmatprep.subr.bf16.mxu0 0
    %195 = vmatpush2.bf16.msra.mxu0 0
    %196 = vmatprep.subr.bf16.mxu0 0
    %197 = vmatpush2.bf16.msra.mxu0 0
    %198 = vmatprep.subr.bf16.mxu0 0
    %199 = vmatpush2.bf16.msra.mxu0 0
    %200 = vmatprep.subr.bf16.mxu0 0
    %201 = vmatpush2.bf16.msra.mxu0 0
    %202 = vmatprep.subr.bf16.mxu0 0
    %203 = vmatpush2.bf16.msra.mxu0 0
    %204 = vmatprep.subr.bf16.mxu0 0
    %205 = vmatpush2.bf16.msra.mxu0 0
    %206 = vmatprep.subr.bf16.mxu0 0
    %207 = vmatpush2.bf16.msra.mxu0 0
    %208 = vmatprep.subr.bf16.mxu0 0
    %209 = vmatpush2.bf16.msra.mxu0 0
    %210 = vmatprep.mubr.bf16.mxu0 0
    %211 = vmatmul.mubr.bf16.gmra.mxu0 %v176
    %v212 = vpop.f32.mrf.mxu0
    %v213 = vadd.f32 %v160, %v212
    %v214 = vpop.f32.mrf.mxu0
    %v215 = vpop.f32.mrf.mxu0
    %v216 = vpop.f32.mrf.mxu0
    %217 = vdwg.mxu0
    %v218 = vmax.f32 %v213, 0.0
    %v219 = vld [vmem:[#allocation8] sm:$0xf]
    %v220 = vld [vmem:[#allocation8 + $0x4] sm:$0xf]
    %v221 = vld [vmem:[#allocation8 + $0x8] sm:$0xf]
    %v222 = vld [vmem:[#allocation8 + $0xc] sm:$0xf]
    %v223 = vld [vmem:[%s6] sm:$0x1]
    %v224 = vpack.c.bf16 %v218, %v218
    %v226 = vlaneseq
    %v227 = vshrl.u32 %v226, 7
    %v228 = vsub.s32 0, %v227
    %v229 = vrot.slane %v223, %v228
    %v235 = vunpack.c.l.b16 %v219
    %v236 = vunpack.c.l.b16 %v220
    %v237 = vunpack.c.l.b16 %v221
    %v238 = vunpack.c.l.b16 %v222
    %v239 = vpack.c.b16 %v236, %v235
    %v240 = vpack.c.b16 %v238, %v237
    %v244 = vsel %vm174, %v224, 0
    %246 = vmatprep.subr.bf16.mxu0 0
    %247 = vmatpush1.bf16.msra.mxu0 0
    %248 = vmatprep.subr.bf16.mxu0 0
    %249 = vmatpush1.bf16.msra.mxu0 0
    %250 = vmatprep.subr.bf16.mxu0 0
    %251 = vmatpush1.bf16.msra.mxu0 0
    %252 = vmatprep.subr.bf16.mxu0 0
    %253 = vmatpush1.bf16.msra.mxu0 0
    %254 = vmatprep.subr.bf16.mxu0 0
    %255 = vmatpush1.bf16.msra.mxu0 0
    %256 = vmatprep.subr.bf16.mxu0 0
    %257 = vmatpush1.bf16.msra.mxu0 0
    %258 = vmatprep.subr.bf16.mxu0 0
    %259 = vmatpush1.bf16.msra.mxu0 %v240
    %260 = vmatprep.subr.bf16.mxu0 0
    %261 = vmatpush1.bf16.msra.mxu0 %v239
    %262 = vmatprep.subr.bf16.mxu0 0
    %263 = vmatpush2.bf16.msra.mxu0 0
    %264 = vmatprep.subr.bf16.mxu0 0
    %265 = vmatpush2.bf16.msra.mxu0 0
    %266 = vmatprep.subr.bf16.mxu0 0
    %267 = vmatpush2.bf16.msra.mxu0 0
    %268 = vmatprep.subr.bf16.mxu0 0
    %269 = vmatpush2.bf16.msra.mxu0 0
    %270 = vmatprep.subr.bf16.mxu0 0
    %271 = vmatpush2.bf16.msra.mxu0 0
    %272 = vmatprep.subr.bf16.mxu0 0
    %273 = vmatpush2.bf16.msra.mxu0 0
    %274 = vmatprep.subr.bf16.mxu0 0
    %275 = vmatpush2.bf16.msra.mxu0 0
    %276 = vmatprep.subr.bf16.mxu0 0
    %277 = vmatpush2.bf16.msra.mxu0 0
    %278 = vmatprep.mubr.bf16.mxu0 0
    %279 = vmatmul.mubr.bf16.gmra.mxu0 %v244
    %v280 = vpop.f32.mrf.mxu0
    %v281 = vadd.f32 %v229, %v280
    %v282 = vpop.f32.mrf.mxu0
    %v283 = vpop.f32.mrf.mxu0
    %v284 = vpop.f32.mrf.mxu0
    %285 = vdwg.mxu0
    %v286 = vmax.f32 %v281, 0.0
    %v287 = vld [vmem:[%s7] sm:$0x1]
    %v288 = vld [vmem:[#allocation2] sm:$0x1]
    %v290 = vlaneseq
    %v291 = vshrl.u32 %v290, 7
    %v292 = vsub.s32 0, %v291
    %v293 = vrot.slane %v287, %v292
    %v295 = vmul.f32 %v286, %v293
    %v296 = vsel %vm174, %v295, 0.0
    %297 = vadd.xlane.f32.xlu0 %v296
    %v298 = vpop.xlane.xlu0 %297
    %v300 = vlaneseq
    %v301 = vshrl.u32 %v300, 7
    %v302 = vsub.s32 0, %v301
    %v303 = vrot.slane %v288, %v302
    %v305 = vadd.f32 %v298, %v303
    %vm306 = vcmask 7168
    %307 = vst.msk [vmem:[%s9] sm:$0xff] %vm306, %v305
    // Predicated region
    $region54: #{tpu_custom_call.1} parent=1 // pred_check
      _
    $region55: #{tpu_custom_call.1} parent=1 // pred_check_branch
      %309 = sbr.rel (0) target = $region57
    $region56: #{tpu_custom_call.1} parent=1 // pred_region
      _
    $region57: #{tpu_custom_call.1} parent=1 // pred_fallthru
      _
    // Predicated region
    $region58: #{tpu_custom_call.1} parent=1 // pred_check
      _
    $region59: #{tpu_custom_call.1} parent=1 // pred_check_branch
      %311 = sbr.rel (0) target = $region61
    $region60: #{tpu_custom_call.1} parent=1 // pred_region
      _
    $region61: #{tpu_custom_call.1} parent=1 // pred_fallthru
      _
    %312 = vsyncpa [#allocation4], 1
    %313 = vsyncpa [#allocation6], 1
    %314 = vsyncpa [#allocation9], 1

</llo_original>
